<compile_context>
chip_gen: v6e
topology: v6e:2x2x1
jax: 0.10.0
libtpu: 0.0.40
codegen_flags: <defaults>
</compile_context>

<pallas_src>
import jax
import jax.numpy as jnp
from jax.experimental import pallas as pl
from jax.experimental.pallas import tpu as pltpu

LN_EPS = 1e-5
D_IN, D_HID, D_OUT = 128, 256, 64


def _fused_mlp_ln_kernel(x_ref, w1_ref, b1_ref, gamma_ref, beta_ref,
                         w2_ref, b2_ref, o_ref):
    # ---- Linear1: [TM,128]bf16 @ [128,256]bf16 -> f32 on the MXU ----
    x_bf = x_ref[...].astype(jnp.bfloat16)
    h = jnp.dot(x_bf, w1_ref[...], preferred_element_type=jnp.float32)
    h = h + b1_ref[...]                       # f32 bias, broadcast over rows

    # ---- LayerNorm over the 256 dim (biased variance, eps=1e-5), f32 ----
    mean = jnp.mean(h, axis=-1, keepdims=True)
    centered = h - mean
    var = jnp.mean(centered * centered, axis=-1, keepdims=True)
    inv = jax.lax.rsqrt(var + LN_EPS)
    h_ln = centered * inv * gamma_ref[...] + beta_ref[...]

    # ---- Linear2: cast to bf16 only at the dot; f32 accumulation ----
    out = jnp.dot(h_ln.astype(jnp.bfloat16), w2_ref[...],
                  preferred_element_type=jnp.float32)
    out = out + b2_ref[...]
    o_ref[...] = out.astype(o_ref.dtype)


def simple_test_model(x, params, *, max_block_tokens=1024):
    """x: (B, S, 128) float32. Returns (B, S, 64) float32."""
    w1, b1, gamma, beta, w2, b2 = params
    B, S, _ = x.shape
    T = B * S
    x2d = x.reshape(T, D_IN)

    # Token tile: multiple of 8 (sublanes), capped at 1024 so that the
    # double-buffered x/out tiles + resident weights + f32 intermediates stay
    # a couple of MiB -- comfortably inside the scoped VMEM limit on
    # v5e (16 MiB), v6e (32 MiB) and v7x (32 MiB scoped / 64 MiB physical).
    tm = min(max_block_tokens, ((T + 7) // 8) * 8)
    n_blocks = pl.cdiv(T, tm)
    t_pad = n_blocks * tm
    if t_pad != T:
        x2d = jnp.pad(x2d, ((0, t_pad - T), (0, 0)))

    # bf16 weights for the MXU; biases / LN affine stay f32.
    w1_bf = w1.astype(jnp.bfloat16)
    w2_bf = w2.astype(jnp.bfloat16)

    out2d = pl.pallas_call(
        _fused_mlp_ln_kernel,
        out_shape=jax.ShapeDtypeStruct((t_pad, D_OUT), x.dtype),
        grid=(n_blocks,),
        in_specs=[
            pl.BlockSpec((tm, D_IN), lambda i: (i, 0)),      # streamed x tile
            pl.BlockSpec((D_IN, D_HID), lambda i: (0, 0)),   # w1 (resident)
            pl.BlockSpec((1, D_HID), lambda i: (0, 0)),      # b1
            pl.BlockSpec((1, D_HID), lambda i: (0, 0)),      # gamma
            pl.BlockSpec((1, D_HID), lambda i: (0, 0)),      # beta
            pl.BlockSpec((D_HID, D_OUT), lambda i: (0, 0)),  # w2 (resident)
            pl.BlockSpec((1, D_OUT), lambda i: (0, 0)),      # b2
        ],
        out_specs=pl.BlockSpec((tm, D_OUT), lambda i: (i, 0)),
        compiler_params=pltpu.CompilerParams(
            dimension_semantics=("parallel",)),
    )(x2d, w1_bf, b1, gamma, beta, w2_bf, b2)

    if t_pad != T:
        out2d = out2d[:T]
    return out2d.reshape(B, S, D_OUT)


def init_params(key):
    """Deterministic init mirroring PyTorch shapes.
       Linear weights stored transposed as [in, out]."""
    k1, k2, k3, k4 = jax.random.split(key, 4)
    lim1 = 1.0 / jnp.sqrt(D_IN)
    lim2 = 1.0 / jnp.sqrt(D_HID)
    w1 = jax.random.uniform(k1, (D_IN, D_HID), jnp.float32, -lim1, lim1)
    b1 = jax.random.uniform(k2, (1, D_HID), jnp.float32, -lim1, lim1)
    gamma = jnp.ones((1, D_HID), jnp.float32)   # LayerNorm weight init
    beta = jnp.zeros((1, D_HID), jnp.float32)   # LayerNorm bias init
    w2 = jax.random.uniform(k3, (D_HID, D_OUT), jnp.float32, -lim2, lim2)
    b2 = jax.random.uniform(k4, (1, D_OUT), jnp.float32, -lim2, lim2)
    return (w1, b1, gamma, beta, w2, b2)


def reference(x, params):
    """Pure f32 reference matching the PyTorch module."""
    w1, b1, gamma, beta, w2, b2 = params
    h = x @ w1 + b1[0]
    mean = h.mean(-1, keepdims=True)
    var = ((h - mean) ** 2).mean(-1, keepdims=True)
    h = (h - mean) / jnp.sqrt(var + LN_EPS) * gamma[0] + beta[0]
    return h @ w2 + b2[0]


if __name__ == "__main__":
    key = jax.random.PRNGKey(0)
    kx, kp = jax.random.split(key)
    # NOTE: at T=16 this call is overhead/weight-DMA dominated; the kernel is
    # tiled for large token counts (it pipelines x in TM-row tiles).
    B, S = 2, 8
    x = jax.random.normal(kx, (B, S, D_IN), jnp.float32)
    params = init_params(kp)

    fwd = jax.jit(simple_test_model)
    out = fwd(x, params)
    out = jax.block_until_ready(out)

    ref = reference(x, params)
    assert out.shape == (B, S, D_OUT), out.shape
    # bf16 MXU operands (f32 accumulation) -> loosened tolerance vs f32 ref.
    assert jnp.allclose(out, ref, atol=3e-2, rtol=3e-2), \
        float(jnp.max(jnp.abs(out - ref)))
    print("KERNEL_OK")
</pallas_src>

<mosaic_0001>
module attributes {stable_mosaic.version = 11 : i64} {
  func.func @_fused_mlp_ln_kernel(%arg0: i32, %arg1: memref<16x128xf32, #tpu.memory_space<vmem>>, %arg2: memref<128x256xbf16, #tpu.memory_space<vmem>>, %arg3: memref<1x256xf32, #tpu.memory_space<vmem>>, %arg4: memref<1x256xf32, #tpu.memory_space<vmem>>, %arg5: memref<1x256xf32, #tpu.memory_space<vmem>>, %arg6: memref<256x64xbf16, #tpu.memory_space<vmem>>, %arg7: memref<1x64xf32, #tpu.memory_space<vmem>>, %arg8: memref<16x64xf32, #tpu.memory_space<vmem>>) attributes {dimension_semantics = [#tpu.dimension_semantics<parallel>], iteration_bounds = array<i64: 1>, scalar_prefetch = 0 : i64, scratch_operands = 0 : i64, tpu.core_type = #tpu.core_type<tc>, window_params = [{transform_indices = @transform_0, window_bounds = array<i64: 16, 128>}, {pipeline_mode = #tpu.pipeline_mode<synchronous>, transform_indices = @transform_1, window_bounds = array<i64: 128, 256>}, {pipeline_mode = #tpu.pipeline_mode<synchronous>, transform_indices = @transform_2, window_bounds = array<i64: 1, 256>}, {pipeline_mode = #tpu.pipeline_mode<synchronous>, transform_indices = @transform_3, window_bounds = array<i64: 1, 256>}, {pipeline_mode = #tpu.pipeline_mode<synchronous>, transform_indices = @transform_4, window_bounds = array<i64: 1, 256>}, {pipeline_mode = #tpu.pipeline_mode<synchronous>, transform_indices = @transform_5, window_bounds = array<i64: 256, 64>}, {pipeline_mode = #tpu.pipeline_mode<synchronous>, transform_indices = @transform_6, window_bounds = array<i64: 1, 64>}, {transform_indices = @transform_7, window_bounds = array<i64: 16, 64>}]} {
    %c0 = arith.constant 0 : index
    %c0_0 = arith.constant 0 : index
    %0 = vector.load %arg1[%c0, %c0_0] : memref<16x128xf32, #tpu.memory_space<vmem>>, vector<16x128xf32>
    %1 = arith.truncf %0 : vector<16x128xf32> to vector<16x128xbf16>
    %c0_1 = arith.constant 0 : index
    %c0_2 = arith.constant 0 : index
    %2 = vector.load %arg2[%c0_1, %c0_2] : memref<128x256xbf16, #tpu.memory_space<vmem>>, vector<128x256xbf16>
    %cst = arith.constant dense<0.000000e+00> : vector<16x256xf32>
    %3 = tpu.matmul %1, %2, %cst {dimension_numbers = #tpu.dot_dimension_numbers<[1], [0], [0], [1], [0, 0, 1, 1], [], []>} : vector<16x128xbf16>, vector<128x256xbf16>, vector<16x256xf32> -> vector<16x256xf32>
    %c0_3 = arith.constant 0 : index
    %c0_4 = arith.constant 0 : index
    %4 = vector.load %arg3[%c0_3, %c0_4] : memref<1x256xf32, #tpu.memory_space<vmem>>, vector<1x256xf32>
    %5 = vector.broadcast %4 : vector<1x256xf32> to vector<16x256xf32>
    %6 = arith.addf %3, %5 : vector<16x256xf32>
    %cst_5 = arith.constant dense<0.000000e+00> : vector<16xf32>
    %7 = vector.multi_reduction <add>, %6, %cst_5 [1] : vector<16x256xf32> to vector<16xf32>
    %8 = vector.shape_cast %7 : vector<16xf32> to vector<16x1xf32>
    %cst_6 = arith.constant 2.560000e+02 : f32
    %9 = vector.broadcast %cst_6 : f32 to vector<16x1xf32>
    %10 = arith.divf %8, %9 : vector<16x1xf32>
    %11 = vector.broadcast %10 : vector<16x1xf32> to vector<16x256xf32>
    %12 = arith.subf %6, %11 : vector<16x256xf32>
    %13 = arith.mulf %12, %12 : vector<16x256xf32>
    %cst_7 = arith.constant dense<0.000000e+00> : vector<16xf32>
    %14 = vector.multi_reduction <add>, %13, %cst_7 [1] : vector<16x256xf32> to vector<16xf32>
    %15 = vector.shape_cast %14 : vector<16xf32> to vector<16x1xf32>
    %cst_8 = arith.constant 2.560000e+02 : f32
    %16 = vector.broadcast %cst_8 : f32 to vector<16x1xf32>
    %17 = arith.divf %15, %16 : vector<16x1xf32>
    %cst_9 = arith.constant 9.99999974E-6 : f32
    %18 = vector.broadcast %cst_9 : f32 to vector<16x1xf32>
    %19 = arith.addf %17, %18 : vector<16x1xf32>
    %20 = math.rsqrt %19 : vector<16x1xf32>
    %21 = vector.broadcast %20 : vector<16x1xf32> to vector<16x256xf32>
    %22 = arith.mulf %12, %21 : vector<16x256xf32>
    %c0_10 = arith.constant 0 : index
    %c0_11 = arith.constant 0 : index
    %23 = vector.load %arg4[%c0_10, %c0_11] : memref<1x256xf32, #tpu.memory_space<vmem>>, vector<1x256xf32>
    %24 = vector.broadcast %23 : vector<1x256xf32> to vector<16x256xf32>
    %25 = arith.mulf %22, %24 : vector<16x256xf32>
    %c0_12 = arith.constant 0 : index
    %c0_13 = arith.constant 0 : index
    %26 = vector.load %arg5[%c0_12, %c0_13] : memref<1x256xf32, #tpu.memory_space<vmem>>, vector<1x256xf32>
    %27 = vector.broadcast %26 : vector<1x256xf32> to vector<16x256xf32>
    %28 = arith.addf %25, %27 : vector<16x256xf32>
    %29 = arith.truncf %28 : vector<16x256xf32> to vector<16x256xbf16>
    %c0_14 = arith.constant 0 : index
    %c0_15 = arith.constant 0 : index
    %30 = vector.load %arg6[%c0_14, %c0_15] : memref<256x64xbf16, #tpu.memory_space<vmem>>, vector<256x64xbf16>
    %cst_16 = arith.constant dense<0.000000e+00> : vector<16x64xf32>
    %31 = tpu.matmul %29, %30, %cst_16 {dimension_numbers = #tpu.dot_dimension_numbers<[1], [0], [0], [1], [0, 0, 1, 1], [], []>} : vector<16x256xbf16>, vector<256x64xbf16>, vector<16x64xf32> -> vector<16x64xf32>
    %c0_17 = arith.constant 0 : index
    %c0_18 = arith.constant 0 : index
    %32 = vector.load %arg7[%c0_17, %c0_18] : memref<1x64xf32, #tpu.memory_space<vmem>>, vector<1x64xf32>
    %33 = vector.broadcast %32 : vector<1x64xf32> to vector<16x64xf32>
    %34 = arith.addf %31, %33 : vector<16x64xf32>
    %c0_19 = arith.constant 0 : index
    %c0_20 = arith.constant 0 : index
    %35 = vector.load %arg8[%c0_19, %c0_20] : memref<16x64xf32, #tpu.memory_space<vmem>>, vector<16x64xf32>
    tpu.vector_store %arg8[%c0_19, %c0_20], %34 {strides = array<i32>} : memref<16x64xf32, #tpu.memory_space<vmem>>, vector<16x64xf32>,
    return
  }
  func.func @transform_0(%arg0: i32) -> (i32, i32) {
    %c0_i32 = arith.constant 0 : i32
    %c0_i32_0 = arith.constant 0 : i32
    return %arg0, %c0_i32 : i32, i32
  }
  func.func @transform_1(%arg0: i32) -> (i32, i32) {
    %c0_i32 = arith.constant 0 : i32
    %c0_i32_0 = arith.constant 0 : i32
    %c0_i32_1 = arith.constant 0 : i32
    return %c0_i32, %c0_i32_0 : i32, i32
  }
  func.func @transform_2(%arg0: i32) -> (i32, i32) {
    %c0_i32 = arith.constant 0 : i32
    %c0_i32_0 = arith.constant 0 : i32
    %c0_i32_1 = arith.constant 0 : i32
    return %c0_i32, %c0_i32_0 : i32, i32
  }
  func.func @transform_3(%arg0: i32) -> (i32, i32) {
    %c0_i32 = arith.constant 0 : i32
    %c0_i32_0 = arith.constant 0 : i32
    %c0_i32_1 = arith.constant 0 : i32
    return %c0_i32, %c0_i32_0 : i32, i32
  }
  func.func @transform_4(%arg0: i32) -> (i32, i32) {
    %c0_i32 = arith.constant 0 : i32
    %c0_i32_0 = arith.constant 0 : i32
    %c0_i32_1 = arith.constant 0 : i32
    return %c0_i32, %c0_i32_0 : i32, i32
  }
  func.func @transform_5(%arg0: i32) -> (i32, i32) {
    %c0_i32 = arith.constant 0 : i32
    %c0_i32_0 = arith.constant 0 : i32
    %c0_i32_1 = arith.constant 0 : i32
    return %c0_i32, %c0_i32_0 : i32, i32
  }
  func.func @transform_6(%arg0: i32) -> (i32, i32) {
    %c0_i32 = arith.constant 0 : i32
    %c0_i32_0 = arith.constant 0 : i32
    %c0_i32_1 = arith.constant 0 : i32
    return %c0_i32, %c0_i32_0 : i32, i32
  }
  func.func @transform_7(%arg0: i32) -> (i32, i32) {
    %c0_i32 = arith.constant 0 : i32
    %c0_i32_0 = arith.constant 0 : i32
    return %arg0, %c0_i32 : i32, i32
  }
}

</mosaic_0001>

<llo_original>
// kernel: simple_test_model.1
$region0: #{simple_test_model.1}
  #allocation0 [shape = 'u32[]', space=smem, size = 0x4, offset = 0x4, fixed_abs, tag = 'smem constant byte address 0x4 - core index']
  #allocation1 [shape = 'u32[144,128]{1,0:T(1,128)}', space=vmem, size = 0x12000, scoped, tag = 'internal scratch']
  %s0 = inlined_call_operand.vmem [shape: f32[16,128], index: 0, kind: input, shape index: {}]
  %s1 = inlined_call_operand.vmem [shape: bf16[128,256], index: 1, kind: input, shape index: {}]
  %s2 = inlined_call_operand.vmem [shape: f32[1,256], index: 2, kind: input, shape index: {}]
  %s3 = inlined_call_operand.vmem [shape: f32[1,256], index: 3, kind: input, shape index: {}]
  %s4 = inlined_call_operand.vmem [shape: f32[1,256], index: 4, kind: input, shape index: {}]
  %s5 = inlined_call_operand.vmem [shape: bf16[256,64], index: 5, kind: input, shape index: {}]
  %s6 = inlined_call_operand.vmem [shape: f32[1,64], index: 6, kind: input, shape index: {}]
  %s7 = inlined_call_operand.hbm [shape: f32[16,64], index: 7, kind: output, shape index: {}]
  %s8 = sld [smem:[#allocation0]]
  $region38: #{simple_test_model.1} parent=0
    _
  %s10 = ssub.s32 1, %s8
  %s11 = scalar_select 0, %s10, %s8
  $region1: #{simple_test_model.1} parent=0
    #allocation2 [shape = 'u8[8192]{0}', space=vmem, size = 0x2000, scoped, tag = 'output window, operand 0, single buffered']
    #allocation3 [shape = 's32[1]{0}', space=sflag, size = 0x4, scoped, tag = 'scoped memory for simple_test_model.1']
    %12 = vsyncpa [#allocation3], 0
    // Predicated region
    $region2: #{simple_test_model.1} parent=1 // pred_check
      _
    $region3: #{simple_test_model.1} parent=1 // pred_check_branch
      %14 = sbr.rel (0) target = $region5
    $region4: #{simple_test_model.1} parent=1 // pred_region
      _
    $region5: #{simple_test_model.1} parent=1 // pred_fallthru
      _
    // Predicated region
    $region6: #{simple_test_model.1} parent=1 // pred_check
      _
    $region7: #{simple_test_model.1} parent=1 // pred_check_branch
      %16 = sbr.rel (0) target = $region9
    $region8: #{simple_test_model.1} parent=1 // pred_region
      _
    $region9: #{simple_test_model.1} parent=1 // pred_fallthru
      _
    // Predicated region
    $region10: #{simple_test_model.1} parent=1 // pred_check
      _
    $region11: #{simple_test_model.1} parent=1 // pred_check_branch
      %18 = sbr.rel (0) target = $region13
    $region12: #{simple_test_model.1} parent=1 // pred_region
      _
    $region13: #{simple_test_model.1} parent=1 // pred_fallthru
      _
    // Predicated region
    $region14: #{simple_test_model.1} parent=1 // pred_check
      _
    $region15: #{simple_test_model.1} parent=1 // pred_check_branch
      %20 = sbr.rel (0) target = $region17
    $region16: #{simple_test_model.1} parent=1 // pred_region
      _
    $region17: #{simple_test_model.1} parent=1 // pred_fallthru
      _
    // Predicated region
    $region18: #{simple_test_model.1} parent=1 // pred_check
      _
    $region19: #{simple_test_model.1} parent=1 // pred_check_branch
      %22 = sbr.rel (0) target = $region21
    $region20: #{simple_test_model.1} parent=1 // pred_region
      _
    $region21: #{simple_test_model.1} parent=1 // pred_fallthru
      _
    // Predicated region
    $region22: #{simple_test_model.1} parent=1 // pred_check
      _
    $region23: #{simple_test_model.1} parent=1 // pred_check_branch
      %24 = sbr.rel (0) target = $region25
    $region24: #{simple_test_model.1} parent=1 // pred_region
      _
    $region25: #{simple_test_model.1} parent=1 // pred_fallthru
      _
    // Predicated region
    $region26: #{simple_test_model.1} parent=1 // pred_check
      _
    $region27: #{simple_test_model.1} parent=1 // pred_check_branch
      %26 = sbr.rel (0) target = $region29
    $region28: #{simple_test_model.1} parent=1 // pred_region
      _
    $region29: #{simple_test_model.1} parent=1 // pred_fallthru
      _
    %v28 = vld [vmem:[%s0] sm:$0xff]
    %v29 = vld [vmem:[%s0 + $0x8] sm:$0xff]
    %v30 = vpack.c.bf16 %v29, %v28
    %v31 = vld [vmem:[%s1] sm:$0xff]
    %v32 = vld [vmem:[%s1 + $0x8] sm:$0xff]
    %v33 = vld [vmem:[%s1 + $0x10] sm:$0xff]
    %v34 = vld [vmem:[%s1 + $0x18] sm:$0xff]
    %v35 = vld [vmem:[%s1 + $0x20] sm:$0xff]
    %v36 = vld [vmem:[%s1 + $0x28] sm:$0xff]
    %v37 = vld [vmem:[%s1 + $0x30] sm:$0xff]
    %v38 = vld [vmem:[%s1 + $0x38] sm:$0xff]
    %v39 = vld [vmem:[%s1 + $0x40] sm:$0xff]
    %v40 = vld [vmem:[%s1 + $0x48] sm:$0xff]
    %v41 = vld [vmem:[%s1 + $0x50] sm:$0xff]
    %v42 = vld [vmem:[%s1 + $0x58] sm:$0xff]
    %v43 = vld [vmem:[%s1 + $0x60] sm:$0xff]
    %v44 = vld [vmem:[%s1 + $0x68] sm:$0xff]
    %v45 = vld [vmem:[%s1 + $0x70] sm:$0xff]
    %v46 = vld [vmem:[%s1 + $0x78] sm:$0xff]
    %v47 = vld [vmem:[%s2] sm:$0x3]
    %v49 = vlaneseq
    %v50 = vshrl.u32 %v49, 7
    %v51 = vsub.s32 0, %v50
    %v52 = vrot.slane %v47, %v51
    %v53 = vlaneseq
    %v54 = vshrl.u32 %v53, 7
    %v55 = vsub.s32 1, %v54
    %v56 = vrot.slane %v47, %v55
    %v75 = vunpack.c.l.b16 %v31
    %v76 = vunpack.c.h.b16 %v31
    %v77 = vunpack.c.l.b16 %v32
    %v78 = vunpack.c.h.b16 %v32
    %v79 = vunpack.c.l.b16 %v33
    %v80 = vunpack.c.h.b16 %v33
    %v81 = vunpack.c.l.b16 %v34
    %v82 = vunpack.c.h.b16 %v34
    %v83 = vunpack.c.l.b16 %v35
    %v84 = vunpack.c.h.b16 %v35
    %v85 = vunpack.c.l.b16 %v36
    %v86 = vunpack.c.h.b16 %v36
    %v87 = vunpack.c.l.b16 %v37
    %v88 = vunpack.c.h.b16 %v37
    %v89 = vunpack.c.l.b16 %v38
    %v90 = vunpack.c.h.b16 %v38
    %v91 = vunpack.c.l.b16 %v39
    %v92 = vunpack.c.h.b16 %v39
    %v93 = vunpack.c.l.b16 %v40
    %v94 = vunpack.c.h.b16 %v40
    %v95 = vunpack.c.l.b16 %v41
    %v96 = vunpack.c.h.b16 %v41
    %v97 = vunpack.c.l.b16 %v42
    %v98 = vunpack.c.h.b16 %v42
    %v99 = vunpack.c.l.b16 %v43
    %v100 = vunpack.c.h.b16 %v43
    %v101 = vunpack.c.l.b16 %v44
    %v102 = vunpack.c.h.b16 %v44
    %v103 = vunpack.c.l.b16 %v45
    %v104 = vunpack.c.h.b16 %v45
    %v105 = vunpack.c.l.b16 %v46
    %v106 = vunpack.c.h.b16 %v46
    %v107 = vpack.c.b16 %v77, %v75
    %v108 = vpack.c.b16 %v78, %v76
    %v109 = vpack.c.b16 %v81, %v79
    %v110 = vpack.c.b16 %v82, %v80
    %v111 = vpack.c.b16 %v85, %v83
    %v112 = vpack.c.b16 %v86, %v84
    %v113 = vpack.c.b16 %v89, %v87
    %v114 = vpack.c.b16 %v90, %v88
    %v115 = vpack.c.b16 %v93, %v91
    %v116 = vpack.c.b16 %v94, %v92
    %v117 = vpack.c.b16 %v97, %v95
    %v118 = vpack.c.b16 %v98, %v96
    %v119 = vpack.c.b16 %v101, %v99
    %v120 = vpack.c.b16 %v102, %v100
    %v121 = vpack.c.b16 %v105, %v103
    %v122 = vpack.c.b16 %v106, %v104
    %139 = vmatprep.subr.bf16.mxu0 %v122
    %140 = vmatpush1.bf16.msra.mxu0 %v121
    %141 = vmatprep.subr.bf16.mxu0 %v120
    %142 = vmatpush1.bf16.msra.mxu0 %v119
    %143 = vmatprep.subr.bf16.mxu0 %v118
    %144 = vmatpush1.bf16.msra.mxu0 %v117
    %145 = vmatprep.subr.bf16.mxu0 %v116
    %146 = vmatpush1.bf16.msra.mxu0 %v115
    %147 = vmatprep.subr.bf16.mxu0 %v114
    %148 = vmatpush1.bf16.msra.mxu0 %v113
    %149 = vmatprep.subr.bf16.mxu0 %v112
    %150 = vmatpush1.bf16.msra.mxu0 %v111
    %151 = vmatprep.subr.bf16.mxu0 %v110
    %152 = vmatpush1.bf16.msra.mxu0 %v109
    %153 = vmatprep.subr.bf16.mxu0 %v108
    %154 = vmatpush1.bf16.msra.mxu0 %v107
    %155 = vmatprep.subr.bf16.mxu0 0
    %156 = vmatpush2.bf16.msra.mxu0 0
    %157 = vmatprep.subr.bf16.mxu0 0
    %158 = vmatpush2.bf16.msra.mxu0 0
    %159 = vmatprep.subr.bf16.mxu0 0
    %160 = vmatpush2.bf16.msra.mxu0 0
    %161 = vmatprep.subr.bf16.mxu0 0
    %162 = vmatpush2.bf16.msra.mxu0 0
    %163 = vmatprep.subr.bf16.mxu0 0
    %164 = vmatpush2.bf16.msra.mxu0 0
    %165 = vmatprep.subr.bf16.mxu0 0
    %166 = vmatpush2.bf16.msra.mxu0 0
    %167 = vmatprep.subr.bf16.mxu0 0
    %168 = vmatpush2.bf16.msra.mxu0 0
    %169 = vmatprep.subr.bf16.mxu0 0
    %170 = vmatpush2.bf16.msra.mxu0 0
    %171 = vmatprep.mubr.bf16.mxu0 0
    %172 = vmatmul.mubr.bf16.gmra.mxu0 %v30
    %v173 = vpop.f32.mrf.mxu0
    %v174 = vadd.f32 %v52, %v173
    %v175 = vpop.f32.mrf.mxu0
    %v176 = vadd.f32 %v56, %v175
    %v177 = vpop.f32.mrf.mxu0
    %v178 = vadd.f32 %v52, %v177
    %v179 = vpop.f32.mrf.mxu0
    %v180 = vadd.f32 %v56, %v179
    %181 = vdwg.mxu0
    %v182 = vadd.f32 %v174, %v176
    %183 = vadd.xlane.f32.xlu0 %v182
    %v184 = vpop.xlane.xlu0 %183
    %v185 = vadd.f32 %v178, %v180
    %186 = vadd.xlane.f32.xlu0 %v185
    %v187 = vpop.xlane.xlu0 %186
    %v188 = vrcp.pop 256.0
    %v189 = vmul.f32 %v184, %v188
    %v190 = vmul.f32 %v187, %v188
    %v191 = vsub.f32 %v174, %v189
    %v192 = vsub.f32 %v176, %v189
    %v193 = vsub.f32 %v178, %v190
    %v194 = vsub.f32 %v180, %v190
    %v195 = vmul.f32 %v191, %v191
    %v196 = vmul.f32 %v192, %v192
    %v197 = vmul.f32 %v193, %v193
    %v198 = vmul.f32 %v194, %v194
    %v199 = vadd.f32 %v195, %v196
    %200 = vadd.xlane.f32.xlu0 %v199
    %v201 = vpop.xlane.xlu0 %200
    %v202 = vadd.f32 %v197, %v198
    %203 = vadd.xlane.f32.xlu0 %v202
    %v204 = vpop.xlane.xlu0 %203
    %v205 = vmul.f32 %v201, %v188
    %v206 = vmul.f32 %v204, %v188
    %v207 = vadd.f32 %v205, 1e-05
    %v208 = vadd.f32 %v206, 1e-05
    %v209 = vrsqrt.pop %v207
    %v210 = vrsqrt.pop %v208
    %v211 = vmul.f32 %v191, %v209
    %v212 = vmul.f32 %v192, %v209
    %v213 = vmul.f32 %v193, %v210
    %v214 = vmul.f32 %v194, %v210
    %v215 = vld [vmem:[%s3] sm:$0x3]
    %v217 = vlaneseq
    %v218 = vshrl.u32 %v217, 7
    %v219 = vsub.s32 0, %v218
    %v220 = vrot.slane %v215, %v219
    %v221 = vlaneseq
    %v222 = vshrl.u32 %v221, 7
    %v223 = vsub.s32 1, %v222
    %v224 = vrot.slane %v215, %v223
    %v227 = vmul.f32 %v211, %v220
    %v228 = vmul.f32 %v212, %v224
    %v229 = vmul.f32 %v213, %v220
    %v230 = vmul.f32 %v214, %v224
    %v231 = vld [vmem:[%s4] sm:$0x3]
    %v233 = vlaneseq
    %v234 = vshrl.u32 %v233, 7
    %v235 = vsub.s32 0, %v234
    %v236 = vrot.slane %v231, %v235
    %v237 = vlaneseq
    %v238 = vshrl.u32 %v237, 7
    %v239 = vsub.s32 1, %v238
    %v240 = vrot.slane %v231, %v239
    %v243 = vadd.f32 %v227, %v236
    %v244 = vadd.f32 %v228, %v240
    %v245 = vadd.f32 %v229, %v236
    %v246 = vadd.f32 %v230, %v240
    %v247 = vpack.c.bf16 %v245, %v243
    %v248 = vpack.c.bf16 %v246, %v244
    %v249 = vld [vmem:[%s5] sm:$0xf]
    %v250 = vld [vmem:[%s5 + $0x4] sm:$0xf]
    %v251 = vld [vmem:[%s5 + $0x8] sm:$0xf]
    %v252 = vld [vmem:[%s5 + $0xc] sm:$0xf]
    %v253 = vld [vmem:[%s5 + $0x10] sm:$0xf]
    %v254 = vld [vmem:[%s5 + $0x14] sm:$0xf]
    %v255 = vld [vmem:[%s5 + $0x18] sm:$0xf]
    %v256 = vld [vmem:[%s5 + $0x1c] sm:$0xf]
    %v257 = vld [vmem:[%s5 + $0x20] sm:$0xf]
    %v258 = vld [vmem:[%s5 + $0x24] sm:$0xf]
    %v259 = vld [vmem:[%s5 + $0x28] sm:$0xf]
    %v260 = vld [vmem:[%s5 + $0x2c] sm:$0xf]
    %v261 = vld [vmem:[%s5 + $0x30] sm:$0xf]
    %v262 = vld [vmem:[%s5 + $0x34] sm:$0xf]
    %v263 = vld [vmem:[%s5 + $0x38] sm:$0xf]
    %v264 = vld [vmem:[%s5 + $0x3c] sm:$0xf]
    %v265 = vld [vmem:[%s5 + $0x40] sm:$0xf]
    %v266 = vld [vmem:[%s5 + $0x44] sm:$0xf]
    %v267 = vld [vmem:[%s5 + $0x48] sm:$0xf]
    %v268 = vld [vmem:[%s5 + $0x4c] sm:$0xf]
    %v269 = vld [vmem:[%s5 + $0x50] sm:$0xf]
    %v270 = vld [vmem:[%s5 + $0x54] sm:$0xf]
    %v271 = vld [vmem:[%s5 + $0x58] sm:$0xf]
    %v272 = vld [vmem:[%s5 + $0x5c] sm:$0xf]
    %v273 = vld [vmem:[%s5 + $0x60] sm:$0xf]
    %v274 = vld [vmem:[%s5 + $0x64] sm:$0xf]
    %v275 = vld [vmem:[%s5 + $0x68] sm:$0xf]
    %v276 = vld [vmem:[%s5 + $0x6c] sm:$0xf]
    %v277 = vld [vmem:[%s5 + $0x70] sm:$0xf]
    %v278 = vld [vmem:[%s5 + $0x74] sm:$0xf]
    %v279 = vld [vmem:[%s5 + $0x78] sm:$0xf]
    %v280 = vld [vmem:[%s5 + $0x7c] sm:$0xf]
    %v281 = vld [vmem:[%s6] sm:$0x1]
    %v283 = vlaneseq
    %v284 = vshrl.u32 %v283, 7
    %v285 = vsub.s32 0, %v284
    %v286 = vrot.slane %v281, %v285
    %v320 = vunpack.c.l.b16 %v249
    %v321 = vunpack.c.l.b16 %v250
    %v322 = vunpack.c.l.b16 %v251
    %v323 = vunpack.c.l.b16 %v252
    %v324 = vunpack.c.l.b16 %v253
    %v325 = vunpack.c.l.b16 %v254
    %v326 = vunpack.c.l.b16 %v255
    %v327 = vunpack.c.l.b16 %v256
    %v328 = vunpack.c.l.b16 %v257
    %v329 = vunpack.c.l.b16 %v258
    %v330 = vunpack.c.l.b16 %v259
    %v331 = vunpack.c.l.b16 %v260
    %v332 = vunpack.c.l.b16 %v261
    %v333 = vunpack.c.l.b16 %v262
    %v334 = vunpack.c.l.b16 %v263
    %v335 = vunpack.c.l.b16 %v264
    %v336 = vunpack.c.l.b16 %v265
    %v337 = vunpack.c.l.b16 %v266
    %v338 = vunpack.c.l.b16 %v267
    %v339 = vunpack.c.l.b16 %v268
    %v340 = vunpack.c.l.b16 %v269
    %v341 = vunpack.c.l.b16 %v270
    %v342 = vunpack.c.l.b16 %v271
    %v343 = vunpack.c.l.b16 %v272
    %v344 = vunpack.c.l.b16 %v273
    %v345 = vunpack.c.l.b16 %v274
    %v346 = vunpack.c.l.b16 %v275
    %v347 = vunpack.c.l.b16 %v276
    %v348 = vunpack.c.l.b16 %v277
    %v349 = vunpack.c.l.b16 %v278
    %v350 = vunpack.c.l.b16 %v279
    %v351 = vunpack.c.l.b16 %v280
    %v352 = vpack.c.b16 %v321, %v320
    %v353 = vpack.c.b16 %v323, %v322
    %v354 = vpack.c.b16 %v325, %v324
    %v355 = vpack.c.b16 %v327, %v326
    %v356 = vpack.c.b16 %v329, %v328
    %v357 = vpack.c.b16 %v331, %v330
    %v358 = vpack.c.b16 %v333, %v332
    %v359 = vpack.c.b16 %v335, %v334
    %v360 = vpack.c.b16 %v337, %v336
    %v361 = vpack.c.b16 %v339, %v338
    %v362 = vpack.c.b16 %v341, %v340
    %v363 = vpack.c.b16 %v343, %v342
    %v364 = vpack.c.b16 %v345, %v344
    %v365 = vpack.c.b16 %v347, %v346
    %v366 = vpack.c.b16 %v349, %v348
    %v367 = vpack.c.b16 %v351, %v350
    %384 = vmatprep.subr.bf16.mxu0 0
    %385 = vmatpush1.bf16.msra.mxu0 %v359
    %386 = vmatprep.subr.bf16.mxu0 0
    %387 = vmatpush1.bf16.msra.mxu0 %v358
    %388 = vmatprep.subr.bf16.mxu0 0
    %389 = vmatpush1.bf16.msra.mxu0 %v357
    %390 = vmatprep.subr.bf16.mxu0 0
    %391 = vmatpush1.bf16.msra.mxu0 %v356
    %392 = vmatprep.subr.bf16.mxu0 0
    %393 = vmatpush1.bf16.msra.mxu0 %v355
    %394 = vmatprep.subr.bf16.mxu0 0
    %395 = vmatpush1.bf16.msra.mxu0 %v354
    %396 = vmatprep.subr.bf16.mxu0 0
    %397 = vmatpush1.bf16.msra.mxu0 %v353
    %398 = vmatprep.subr.bf16.mxu0 0
    %399 = vmatpush1.bf16.msra.mxu0 %v352
    %400 = vmatprep.subr.bf16.mxu0 0
    %401 = vmatpush2.bf16.msra.mxu0 %v367
    %402 = vmatprep.subr.bf16.mxu0 0
    %403 = vmatpush2.bf16.msra.mxu0 %v366
    %404 = vmatprep.subr.bf16.mxu0 0
    %405 = vmatpush2.bf16.msra.mxu0 %v365
    %406 = vmatprep.subr.bf16.mxu0 0
    %407 = vmatpush2.bf16.msra.mxu0 %v364
    %408 = vmatprep.subr.bf16.mxu0 0
    %409 = vmatpush2.bf16.msra.mxu0 %v363
    %410 = vmatprep.subr.bf16.mxu0 0
    %411 = vmatpush2.bf16.msra.mxu0 %v362
    %412 = vmatprep.subr.bf16.mxu0 0
    %413 = vmatpush2.bf16.msra.mxu0 %v361
    %414 = vmatprep.subr.bf16.mxu0 0
    %415 = vmatpush2.bf16.msra.mxu0 %v360
    %416 = vmatprep.mubr.bf16.mxu0 %v248
    %417 = vmatmul.mubr.bf16.gmra.mxu0 %v247
    %v418 = vpop.f32.mrf.mxu0
    %v419 = vadd.f32 %v286, %v418
    %v420 = vpop.f32.mrf.mxu0
    %v421 = vpop.f32.mrf.mxu0
    %v422 = vadd.f32 %v286, %v421
    %v423 = vpop.f32.mrf.mxu0
    %424 = vdwg.mxu0
    %vm425 = vcmask 523264
    %426 = vst.msk [vmem:[#allocation2] sm:$0xff] %vm425, %v419
    %427 = vst.msk [vmem:[#allocation2 + $0x8] sm:$0xff] %vm425, %v422
    // Predicated region
    $region30: #{simple_test_model.1} parent=1 // pred_check
      _
    $region31: #{simple_test_model.1} parent=1 // pred_check_branch
      %429 = sbr.rel (0) target = $region33
    $region32: #{simple_test_model.1} parent=1 // pred_region
      %s431 = ssub.s32 256, 256
      %432 = vsyncadd [#allocation3], %s431
      %s433 = sshll.u32 [#allocation2], 4
      %s434 = int_to_ptr.vmem [resolvable:$true] %s433
      %439 = dma.vmem_to_hbm [thread:$0]  %s434, 256, %s7, [#allocation3], 128, 128, 8
    $region33: #{simple_test_model.1} parent=1 // pred_fallthru
      _
    // Predicated region
    $region34: #{simple_test_model.1} parent=1 // pred_check
      _
    $region35: #{simple_test_model.1} parent=1 // pred_check_branch
      %441 = sbr.rel (0) target = $region37
    $region36: #{simple_test_model.1} parent=1 // pred_region
      %442 = dma.done [#allocation3], 256
    $region37: #{simple_test_model.1} parent=1 // pred_fallthru
      _
    %443 = vsyncpa [#allocation3], 1

</llo_original>
